<compile_context>
chip_gen: v6e
topology: v6e:2x2x1
jax: 0.10.0
libtpu: 0.0.40
codegen_flags: <defaults>
</compile_context>

<pallas_src>
import functools

import jax
import jax.numpy as jnp
from jax.experimental import pallas as pl
from jax.experimental.pallas import tpu as pltpu


def _round_up(a: int, m: int) -> int:
    return ((a + m - 1) // m) * m


def _d_net_kernel(x_ref, w1_ref, b1_ref, w2_ref, b2_ref, out_ref):
    # x_ref : (IN,  TILE_B)   -- batch on the lane axis
    # w1_ref: (H,   IN)       -- PyTorch nn.Linear layout (out_features, in_features)
    # b1_ref: (H,   1)
    # w2_ref: (OUT, H)
    # b2_ref: (OUT, 1)
    # out_ref: (OUT, TILE_B)
    x = x_ref[...].astype(jnp.float32)
    w1 = w1_ref[...].astype(jnp.float32)
    b1 = b1_ref[...].astype(jnp.float32)
    w2 = w2_ref[...].astype(jnp.float32)
    b2 = b2_ref[...].astype(jnp.float32)

    # layer1: Linear(IN -> H) + ReLU            h = relu(W1 @ x + b1)
    h = jnp.maximum(jnp.dot(w1, x, preferred_element_type=jnp.float32) + b1, 0.0)

    # layer2: Linear(H -> OUT)                  o = W2 @ h + b2
    o = jnp.dot(w2, h, preferred_element_type=jnp.float32) + b2

    # sigmoid(o) == 0.5 * (tanh(0.5 * o) + 1)  -- single exact EUP transcendental.
    out_ref[...] = (0.5 * (jnp.tanh(0.5 * o) + 1.0)).astype(out_ref.dtype)


@functools.partial(jax.jit, static_argnames=("tile_b", "out_dtype"))
def d_net_forward_fm(x_fm, w1, b1, w2, b2, *, tile_b: int = 65536,
                     out_dtype=jnp.float32):
    """Feature-major forward pass of D_net (the fast path).

    x_fm: (IN, B)  -- batch on the last (lane) axis, no transpose/pad needed.
    w1  : (H, IN), b1: (H,)     -- PyTorch nn.Linear parameter layout
    w2  : (OUT, H), b2: (OUT,)
    returns (OUT, B) in `out_dtype`.
    """
    IN, B = x_fm.shape
    H = w1.shape[0]
    OUT = w2.shape[0]

    # Lane-aligned batch tile: multiple of 128, no bigger than needed.
    LANE = 128
    tb = min(int(tile_b), _round_up(B, LANE))
    tb = max(LANE, _round_up(tb, LANE))
    grid = (pl.cdiv(B, tb),)  # ragged last block handled by Pallas (no jnp.pad)

    b1_c = b1.reshape(H, 1)
    b2_c = b2.reshape(OUT, 1)

    # Double-buffered VMEM footprint: x tile (10 rows -> 16 sublanes) and
    # out tile (2 rows -> 8 sublanes), both f32. Weights are negligible.
    vmem_needed = 2 * (16 * tb * 4 + 8 * tb * 4) + (1 << 20)
    # Keep at least the 32 MiB default; cap well under v5e/v6e physical VMEM.
    # (On v7x keep tile_b <= ~131072 so this stays under its 64 MiB/TC.)
    vmem_limit = min(max(vmem_needed, 32 << 20), 100 << 20)

    cost = pl.CostEstimate(
        flops=2 * B * (IN * H + H * OUT),
        transcendentals=B * OUT,
        bytes_accessed=B * (IN + OUT) * 4 + (IN * H + H + H * OUT + OUT) * 4,
    )

    out_fm = pl.pallas_call(
        _d_net_kernel,
        out_shape=jax.ShapeDtypeStruct((OUT, B), out_dtype),
        grid=grid,
        in_specs=[
            # activations: tiled along the batch (lane) axis -> pipelined DMA
            pl.BlockSpec((IN, tb), lambda i: (0, i)),
            # weights / biases: single block, VMEM-resident across grid steps
            pl.BlockSpec((H, IN), lambda i: (0, 0)),
            pl.BlockSpec((H, 1), lambda i: (0, 0)),
            pl.BlockSpec((OUT, H), lambda i: (0, 0)),
            pl.BlockSpec((OUT, 1), lambda i: (0, 0)),
        ],
        out_specs=pl.BlockSpec((OUT, tb), lambda i: (0, i)),
        compiler_params=pltpu.CompilerParams(
            dimension_semantics=("parallel",),  # batch tiles are independent
            vmem_limit_bytes=vmem_limit,
        ),
        cost_estimate=cost,
    )(x_fm, w1, b1_c, w2, b2_c)

    return out_fm


@functools.partial(jax.jit, static_argnames=("tile_b", "out_dtype"))
def d_net_forward(x, w1, b1, w2, b2, *, tile_b: int = 65536,
                  out_dtype=jnp.float32):
    """Batch-major compatibility wrapper: x (B, IN) -> (B, OUT).

    Prefer d_net_forward_fm: the transposes here cost extra HBM passes on a
    purely bandwidth-bound kernel.
    """
    out_fm = d_net_forward_fm(x.T, w1, b1, w2, b2,
                              tile_b=tile_b, out_dtype=out_dtype)
    return out_fm.T


def init_d_net_params(key, input_size=10, hidden=5, out_size=2):
    """PyTorch-style nn.Linear init: U(-1/sqrt(fan_in), +1/sqrt(fan_in)).

    Parameters kept in PyTorch layout: W (out_features, in_features), b (out_features,).
    """
    k1, k2, k3, k4 = jax.random.split(key, 4)
    lim1 = 1.0 / jnp.sqrt(jnp.float32(input_size))
    lim2 = 1.0 / jnp.sqrt(jnp.float32(hidden))
    w1 = jax.random.uniform(k1, (hidden, input_size), jnp.float32, -lim1, lim1)
    b1 = jax.random.uniform(k2, (hidden,), jnp.float32, -lim1, lim1)
    w2 = jax.random.uniform(k3, (out_size, hidden), jnp.float32, -lim2, lim2)
    b2 = jax.random.uniform(k4, (out_size,), jnp.float32, -lim2, lim2)
    return w1, b1, w2, b2


def _reference(x, w1, b1, w2, b2):
    # Same math as the PyTorch forward: sigmoid(relu(x @ W1.T + b1) @ W2.T + b2)
    h = jnp.maximum(x @ w1.T + b1, 0.0)
    return jax.nn.sigmoid(h @ w2.T + b2)


if __name__ == "__main__":
    key = jax.random.PRNGKey(0)
    kx, kx2, kp = jax.random.split(key, 3)

    INPUT_SIZE, HIDDEN, OUT_SIZE = 10, 5, 2
    w1, b1, w2, b2 = init_d_net_params(kp, INPUT_SIZE, HIDDEN, OUT_SIZE)

    # 1) Feature-major fast path, small batch (single ragged 128-lane block).
    B = 8
    x_fm = jax.random.normal(kx, (INPUT_SIZE, B), jnp.float32)
    out_fm = jax.block_until_ready(d_net_forward_fm(x_fm, w1, b1, w2, b2))
    ref_fm = _reference(x_fm.T, w1, b1, w2, b2).T
    assert out_fm.shape == (OUT_SIZE, B)
    assert jnp.allclose(out_fm, ref_fm, atol=2e-3, rtol=2e-3), float(
        jnp.max(jnp.abs(out_fm - ref_fm)))

    # 2) Batch-major compat wrapper, multi-step grid + ragged last block
    #    (300 = 2 * 128 + 44 with tile_b=128).
    B2 = 300
    x2 = jax.random.normal(kx2, (B2, INPUT_SIZE), jnp.float32)
    out2 = jax.block_until_ready(d_net_forward(x2, w1, b1, w2, b2, tile_b=128))
    ref2 = _reference(x2, w1, b1, w2, b2)
    assert out2.shape == (B2, OUT_SIZE)
    assert jnp.allclose(out2, ref2, atol=2e-3, rtol=2e-3), float(
        jnp.max(jnp.abs(out2 - ref2)))

    print("KERNEL_OK")
</pallas_src>

<mosaic_0001>
module attributes {stable_mosaic.version = 11 : i64} {
  func.func @_d_net_kernel(%arg0: i32, %arg1: memref<10x128xf32, #tpu.memory_space<vmem>>, %arg2: memref<5x10xf32, #tpu.memory_space<vmem>>, %arg3: memref<5x1xf32, #tpu.memory_space<vmem>>, %arg4: memref<2x5xf32, #tpu.memory_space<vmem>>, %arg5: memref<2x1xf32, #tpu.memory_space<vmem>>, %arg6: memref<2x128xf32, #tpu.memory_space<vmem>>) attributes {dimension_semantics = [#tpu.dimension_semantics<parallel>], iteration_bounds = array<i64: 1>, scalar_prefetch = 0 : i64, scratch_operands = 0 : i64, tpu.core_type = #tpu.core_type<tc>, window_params = [{transform_indices = @transform_0, window_bounds = array<i64: 10, 128>}, {pipeline_mode = #tpu.pipeline_mode<synchronous>, transform_indices = @transform_1, window_bounds = array<i64: 5, 10>}, {pipeline_mode = #tpu.pipeline_mode<synchronous>, transform_indices = @transform_2, window_bounds = array<i64: 5, 1>}, {pipeline_mode = #tpu.pipeline_mode<synchronous>, transform_indices = @transform_3, window_bounds = array<i64: 2, 5>}, {pipeline_mode = #tpu.pipeline_mode<synchronous>, transform_indices = @transform_4, window_bounds = array<i64: 2, 1>}, {transform_indices = @transform_5, window_bounds = array<i64: 2, 128>}]} {
    %c0 = arith.constant 0 : index
    %c0_0 = arith.constant 0 : index
    %0 = vector.load %arg1[%c0, %c0_0] : memref<10x128xf32, #tpu.memory_space<vmem>>, vector<10x128xf32>
    %c0_1 = arith.constant 0 : index
    %c0_2 = arith.constant 0 : index
    %1 = vector.load %arg2[%c0_1, %c0_2] : memref<5x10xf32, #tpu.memory_space<vmem>>, vector<5x10xf32>
    %c0_3 = arith.constant 0 : index
    %c0_4 = arith.constant 0 : index
    %2 = vector.load %arg3[%c0_3, %c0_4] : memref<5x1xf32, #tpu.memory_space<vmem>>, vector<5x1xf32>
    %c0_5 = arith.constant 0 : index
    %c0_6 = arith.constant 0 : index
    %3 = vector.load %arg4[%c0_5, %c0_6] : memref<2x5xf32, #tpu.memory_space<vmem>>, vector<2x5xf32>
    %c0_7 = arith.constant 0 : index
    %c0_8 = arith.constant 0 : index
    %4 = vector.load %arg5[%c0_7, %c0_8] : memref<2x1xf32, #tpu.memory_space<vmem>>, vector<2x1xf32>
    %cst = arith.constant dense<0.000000e+00> : vector<5x128xf32>
    %5 = tpu.matmul %1, %0, %cst {dimension_numbers = #tpu.dot_dimension_numbers<[1], [0], [0], [1], [0, 0, 1, 1], [], []>} : vector<5x10xf32>, vector<10x128xf32>, vector<5x128xf32> -> vector<5x128xf32>
    %6 = vector.broadcast %2 : vector<5x1xf32> to vector<5x128xf32>
    %7 = arith.addf %5, %6 : vector<5x128xf32>
    %cst_9 = arith.constant 0.000000e+00 : f32
    %8 = vector.broadcast %cst_9 : f32 to vector<5x128xf32>
    %9 = arith.maximumf %7, %8 : vector<5x128xf32>
    %cst_10 = arith.constant dense<0.000000e+00> : vector<2x128xf32>
    %10 = tpu.matmul %3, %9, %cst_10 {dimension_numbers = #tpu.dot_dimension_numbers<[1], [0], [0], [1], [0, 0, 1, 1], [], []>} : vector<2x5xf32>, vector<5x128xf32>, vector<2x128xf32> -> vector<2x128xf32>
    %11 = vector.broadcast %4 : vector<2x1xf32> to vector<2x128xf32>
    %12 = arith.addf %10, %11 : vector<2x128xf32>
    %cst_11 = arith.constant 5.000000e-01 : f32
    %13 = vector.broadcast %cst_11 : f32 to vector<2x128xf32>
    %14 = arith.mulf %13, %12 : vector<2x128xf32>
    %15 = math.tanh %14 : vector<2x128xf32>
    %cst_12 = arith.constant 1.000000e+00 : f32
    %16 = vector.broadcast %cst_12 : f32 to vector<2x128xf32>
    %17 = arith.addf %15, %16 : vector<2x128xf32>
    %cst_13 = arith.constant 5.000000e-01 : f32
    %18 = vector.broadcast %cst_13 : f32 to vector<2x128xf32>
    %19 = arith.mulf %18, %17 : vector<2x128xf32>
    %c0_14 = arith.constant 0 : index
    %c0_15 = arith.constant 0 : index
    %20 = vector.load %arg6[%c0_14, %c0_15] : memref<2x128xf32, #tpu.memory_space<vmem>>, vector<2x128xf32>
    tpu.vector_store %arg6[%c0_14, %c0_15], %19 {strides = array<i32>} : memref<2x128xf32, #tpu.memory_space<vmem>>, vector<2x128xf32>,
    return
  }
  func.func @transform_0(%arg0: i32) -> (i32, i32) {
    %c0_i32 = arith.constant 0 : i32
    %c0_i32_0 = arith.constant 0 : i32
    return %c0_i32, %arg0 : i32, i32
  }
  func.func @transform_1(%arg0: i32) -> (i32, i32) {
    %c0_i32 = arith.constant 0 : i32
    %c0_i32_0 = arith.constant 0 : i32
    %c0_i32_1 = arith.constant 0 : i32
    return %c0_i32, %c0_i32_0 : i32, i32
  }
  func.func @transform_2(%arg0: i32) -> (i32, i32) {
    %c0_i32 = arith.constant 0 : i32
    %c0_i32_0 = arith.constant 0 : i32
    %c0_i32_1 = arith.constant 0 : i32
    return %c0_i32, %c0_i32_0 : i32, i32
  }
  func.func @transform_3(%arg0: i32) -> (i32, i32) {
    %c0_i32 = arith.constant 0 : i32
    %c0_i32_0 = arith.constant 0 : i32
    %c0_i32_1 = arith.constant 0 : i32
    return %c0_i32, %c0_i32_0 : i32, i32
  }
  func.func @transform_4(%arg0: i32) -> (i32, i32) {
    %c0_i32 = arith.constant 0 : i32
    %c0_i32_0 = arith.constant 0 : i32
    %c0_i32_1 = arith.constant 0 : i32
    return %c0_i32, %c0_i32_0 : i32, i32
  }
  func.func @transform_5(%arg0: i32) -> (i32, i32) {
    %c0_i32 = arith.constant 0 : i32
    %c0_i32_0 = arith.constant 0 : i32
    return %c0_i32, %arg0 : i32, i32
  }
}

</mosaic_0001>

<llo_original>
// kernel: d_net_forward_fm.1
$region0: #{d_net_forward_fm.1}
  #allocation0 [shape = 'u32[]', space=smem, size = 0x4, offset = 0x4, fixed_abs, tag = 'smem constant byte address 0x4 - core index']
  #allocation1 [shape = 'u32[144,128]{1,0:T(1,128)}', space=vmem, size = 0x12000, scoped, tag = 'internal scratch']
  %s0 = inlined_call_operand.vmem [shape: f32[10,8], index: 0, kind: input, shape index: {}]
  %s1 = inlined_call_operand.vmem [shape: f32[5,10], index: 1, kind: input, shape index: {}]
  %s2 = inlined_call_operand.vmem [shape: f32[5,1], index: 2, kind: input, shape index: {}]
  %s3 = inlined_call_operand.vmem [shape: f32[2,5], index: 3, kind: input, shape index: {}]
  %s4 = inlined_call_operand.vmem [shape: f32[2,1], index: 4, kind: input, shape index: {}]
  %s5 = inlined_call_operand.hbm [shape: f32[2,8], index: 5, kind: output, shape index: {}]
  %s6 = sld [smem:[#allocation0]]
  $region30: #{d_net_forward_fm.1} parent=0
    _
  %s8 = ssub.s32 1, %s6
  %s9 = scalar_select 0, %s8, %s6
  $region1: #{d_net_forward_fm.1} parent=0
    #allocation2 [shape = 'u8[1024]{0}', space=vmem, size = 0x400, scoped, tag = 'output window, operand 0, single buffered']
    #allocation3 [shape = 's32[1]{0}', space=sflag, size = 0x4, scoped, tag = 'scoped memory for d_net_forward_fm.1']
    %10 = vsyncpa [#allocation3], 0
    // Predicated region
    $region2: #{d_net_forward_fm.1} parent=1 // pred_check
      _
    $region3: #{d_net_forward_fm.1} parent=1 // pred_check_branch
      %12 = sbr.rel (0) target = $region5
    $region4: #{d_net_forward_fm.1} parent=1 // pred_region
      _
    $region5: #{d_net_forward_fm.1} parent=1 // pred_fallthru
      _
    // Predicated region
    $region6: #{d_net_forward_fm.1} parent=1 // pred_check
      _
    $region7: #{d_net_forward_fm.1} parent=1 // pred_check_branch
      %14 = sbr.rel (0) target = $region9
    $region8: #{d_net_forward_fm.1} parent=1 // pred_region
      _
    $region9: #{d_net_forward_fm.1} parent=1 // pred_fallthru
      _
    // Predicated region
    $region10: #{d_net_forward_fm.1} parent=1 // pred_check
      _
    $region11: #{d_net_forward_fm.1} parent=1 // pred_check_branch
      %16 = sbr.rel (0) target = $region13
    $region12: #{d_net_forward_fm.1} parent=1 // pred_region
      _
    $region13: #{d_net_forward_fm.1} parent=1 // pred_fallthru
      _
    // Predicated region
    $region14: #{d_net_forward_fm.1} parent=1 // pred_check
      _
    $region15: #{d_net_forward_fm.1} parent=1 // pred_check_branch
      %18 = sbr.rel (0) target = $region17
    $region16: #{d_net_forward_fm.1} parent=1 // pred_region
      _
    $region17: #{d_net_forward_fm.1} parent=1 // pred_fallthru
      _
    // Predicated region
    $region18: #{d_net_forward_fm.1} parent=1 // pred_check
      _
    $region19: #{d_net_forward_fm.1} parent=1 // pred_check_branch
      %20 = sbr.rel (0) target = $region21
    $region20: #{d_net_forward_fm.1} parent=1 // pred_region
      _
    $region21: #{d_net_forward_fm.1} parent=1 // pred_fallthru
      _
    %v21 = vld [vmem:[%s0] sm:$0xff]
    %v22 = vld [vmem:[%s0 + $0x8] sm:$0x3]
    %v23 = vld [vmem:[%s1] sm:$0x1f]
    %v24 = vld [vmem:[%s2] sm:$0x1f]
    %v25 = vld [vmem:[%s3] sm:$0x3]
    %v26 = vld [vmem:[%s4] sm:$0x3]
    %28 = vset.pattern.permute.xlu0 0
    %29 = vperm.xlu0 %28, %v24
    %v30 = vpop.permute.xlu0 %29
    %vm32 = vcmask 80896
    %v34 = vsel %vm32, %v23, 0
    %vm36 = vcmask 1041408
    %v38 = vsel %vm36, %v22, 0
    %40 = vmatprep.subr.mxu0 0.0
    %41 = vmatpush1.msra.mxu0 0.0
    %42 = vmatprep.subr.mxu0 0.0
    %43 = vmatpush1.msra.mxu0 0.0
    %44 = vmatprep.subr.mxu0 0.0
    %45 = vmatpush1.msra.mxu0 0.0
    %46 = vmatprep.subr.mxu0 0.0
    %47 = vmatpush1.msra.mxu0 0.0
    %48 = vmatprep.subr.mxu0 0.0
    %49 = vmatpush1.msra.mxu0 0.0
    %50 = vmatprep.subr.mxu0 0.0
    %51 = vmatpush1.msra.mxu0 0.0
    %52 = vmatprep.subr.mxu0 0.0
    %53 = vmatpush1.msra.mxu0 0.0
    %54 = vmatprep.subr.mxu0 0.0
    %55 = vmatpush1.msra.mxu0 0.0
    %56 = vmatprep.subr.mxu0 0.0
    %57 = vmatpush1.msra.mxu0 0.0
    %58 = vmatprep.subr.mxu0 0.0
    %59 = vmatpush1.msra.mxu0 0.0
    %60 = vmatprep.subr.mxu0 0.0
    %61 = vmatpush1.msra.mxu0 0.0
    %62 = vmatprep.subr.mxu0 0.0
    %63 = vmatpush1.msra.mxu0 0.0
    %64 = vmatprep.subr.mxu0 0.0
    %65 = vmatpush1.msra.mxu0 0.0
    %66 = vmatprep.subr.mxu0 0.0
    %67 = vmatpush1.msra.mxu0 0.0
    %68 = vmatprep.subr.mxu0 0.0
    %69 = vmatpush1.msra.mxu0 %v38
    %70 = vmatprep.subr.mxu0 0.0
    %71 = vmatpush1.msra.mxu0 %v21
    %72 = vmatprep.subr.mxu0 0.0
    %73 = vmatpush2.msra.mxu0 0.0
    %74 = vmatprep.subr.mxu0 0.0
    %75 = vmatpush2.msra.mxu0 0.0
    %76 = vmatprep.subr.mxu0 0.0
    %77 = vmatpush2.msra.mxu0 0.0
    %78 = vmatprep.subr.mxu0 0.0
    %79 = vmatpush2.msra.mxu0 0.0
    %80 = vmatprep.subr.mxu0 0.0
    %81 = vmatpush2.msra.mxu0 0.0
    %82 = vmatprep.subr.mxu0 0.0
    %83 = vmatpush2.msra.mxu0 0.0
    %84 = vmatprep.subr.mxu0 0.0
    %85 = vmatpush2.msra.mxu0 0.0
    %86 = vmatprep.subr.mxu0 0.0
    %87 = vmatpush2.msra.mxu0 0.0
    %88 = vmatprep.subr.mxu0 0.0
    %89 = vmatpush2.msra.mxu0 0.0
    %90 = vmatprep.subr.mxu0 0.0
    %91 = vmatpush2.msra.mxu0 0.0
    %92 = vmatprep.subr.mxu0 0.0
    %93 = vmatpush2.msra.mxu0 0.0
    %94 = vmatprep.subr.mxu0 0.0
    %95 = vmatpush2.msra.mxu0 0.0
    %96 = vmatprep.subr.mxu0 0.0
    %97 = vmatpush2.msra.mxu0 0.0
    %98 = vmatprep.subr.mxu0 0.0
    %99 = vmatpush2.msra.mxu0 0.0
    %100 = vmatprep.subr.mxu0 0.0
    %101 = vmatpush2.msra.mxu0 0.0
    %102 = vmatprep.subr.mxu0 0.0
    %103 = vmatpush2.msra.mxu0 0.0
    %104 = vmatprep.mubr.f32.mxu0 0.0
    %105 = vmatmul.mubr.f32.gmra.mxu0 %v34
    %v106 = vpop.f32.mrf.mxu0
    %v107 = vadd.f32 %v30, %v106
    %v108 = vpop.f32.mrf.mxu0
    %109 = vdwg.mxu0
    %v110 = vmax.f32 %v107, 0.0
    %112 = vset.pattern.permute.xlu0 0
    %113 = vperm.xlu0 %112, %v26
    %v114 = vpop.permute.xlu0 %113
    %vm116 = vcmask 39936
    %v118 = vsel %vm116, %v25, 0
    %vm120 = vcmask 1044480
    %v122 = vsel %vm120, %v110, 0
    %124 = vmatprep.subr.mxu0 0.0
    %125 = vmatpush1.msra.mxu0 0.0
    %126 = vmatprep.subr.mxu0 0.0
    %127 = vmatpush1.msra.mxu0 0.0
    %128 = vmatprep.subr.mxu0 0.0
    %129 = vmatpush1.msra.mxu0 0.0
    %130 = vmatprep.subr.mxu0 0.0
    %131 = vmatpush1.msra.mxu0 0.0
    %132 = vmatprep.subr.mxu0 0.0
    %133 = vmatpush1.msra.mxu0 0.0
    %134 = vmatprep.subr.mxu0 0.0
    %135 = vmatpush1.msra.mxu0 0.0
    %136 = vmatprep.subr.mxu0 0.0
    %137 = vmatpush1.msra.mxu0 0.0
    %138 = vmatprep.subr.mxu0 0.0
    %139 = vmatpush1.msra.mxu0 0.0
    %140 = vmatprep.subr.mxu0 0.0
    %141 = vmatpush1.msra.mxu0 0.0
    %142 = vmatprep.subr.mxu0 0.0
    %143 = vmatpush1.msra.mxu0 0.0
    %144 = vmatprep.subr.mxu0 0.0
    %145 = vmatpush1.msra.mxu0 0.0
    %146 = vmatprep.subr.mxu0 0.0
    %147 = vmatpush1.msra.mxu0 0.0
    %148 = vmatprep.subr.mxu0 0.0
    %149 = vmatpush1.msra.mxu0 0.0
    %150 = vmatprep.subr.mxu0 0.0
    %151 = vmatpush1.msra.mxu0 0.0
    %152 = vmatprep.subr.mxu0 0.0
    %153 = vmatpush1.msra.mxu0 0.0
    %154 = vmatprep.subr.mxu0 0.0
    %155 = vmatpush1.msra.mxu0 %v122
    %156 = vmatprep.subr.mxu0 0.0
    %157 = vmatpush2.msra.mxu0 0.0
    %158 = vmatprep.subr.mxu0 0.0
    %159 = vmatpush2.msra.mxu0 0.0
    %160 = vmatprep.subr.mxu0 0.0
    %161 = vmatpush2.msra.mxu0 0.0
    %162 = vmatprep.subr.mxu0 0.0
    %163 = vmatpush2.msra.mxu0 0.0
    %164 = vmatprep.subr.mxu0 0.0
    %165 = vmatpush2.msra.mxu0 0.0
    %166 = vmatprep.subr.mxu0 0.0
    %167 = vmatpush2.msra.mxu0 0.0
    %168 = vmatprep.subr.mxu0 0.0
    %169 = vmatpush2.msra.mxu0 0.0
    %170 = vmatprep.subr.mxu0 0.0
    %171 = vmatpush2.msra.mxu0 0.0
    %172 = vmatprep.subr.mxu0 0.0
    %173 = vmatpush2.msra.mxu0 0.0
    %174 = vmatprep.subr.mxu0 0.0
    %175 = vmatpush2.msra.mxu0 0.0
    %176 = vmatprep.subr.mxu0 0.0
    %177 = vmatpush2.msra.mxu0 0.0
    %178 = vmatprep.subr.mxu0 0.0
    %179 = vmatpush2.msra.mxu0 0.0
    %180 = vmatprep.subr.mxu0 0.0
    %181 = vmatpush2.msra.mxu0 0.0
    %182 = vmatprep.subr.mxu0 0.0
    %183 = vmatpush2.msra.mxu0 0.0
    %184 = vmatprep.subr.mxu0 0.0
    %185 = vmatpush2.msra.mxu0 0.0
    %186 = vmatprep.subr.mxu0 0.0
    %187 = vmatpush2.msra.mxu0 0.0
    %188 = vmatprep.mubr.f32.mxu0 0.0
    %189 = vmatmul.mubr.f32.gmra.mxu0 %v118
    %v190 = vpop.f32.mrf.mxu0
    %v191 = vadd.f32 %v114, %v190
    %v192 = vpop.f32.mrf.mxu0
    %193 = vdwg.mxu0
    %v194 = vmul.f32 %v191, 0.5
    %v195 = vtanh.pop %v194
    %v196 = vadd.f32 %v195, 1.0
    %v197 = vmul.f32 %v196, 0.5
    %198 = vst [vmem:[#allocation2] sm:$0x3] %v197
    // Predicated region
    $region22: #{d_net_forward_fm.1} parent=1 // pred_check
      _
    $region23: #{d_net_forward_fm.1} parent=1 // pred_check_branch
      %200 = sbr.rel (0) target = $region25
    $region24: #{d_net_forward_fm.1} parent=1 // pred_region
      %s202 = ssub.s32 32, 32
      %203 = vsyncadd [#allocation3], %s202
      %s205 = sshll.u32 [#allocation2], 4
      %s206 = int_to_ptr.vmem [resolvable:$true] %s205
      %208 = dma.vmem_to_hbm [thread:$0]  %s206, 32, %s5, [#allocation3]
    $region25: #{d_net_forward_fm.1} parent=1 // pred_fallthru
      _
    // Predicated region
    $region26: #{d_net_forward_fm.1} parent=1 // pred_check
      _
    $region27: #{d_net_forward_fm.1} parent=1 // pred_check_branch
      %210 = sbr.rel (0) target = $region29
    $region28: #{d_net_forward_fm.1} parent=1 // pred_region
      %211 = dma.done [#allocation3], 32
    $region29: #{d_net_forward_fm.1} parent=1 // pred_fallthru
      _
    %212 = vsyncpa [#allocation3], 1

</llo_original>
